<compile_context>
chip_gen: v7x
topology: tpu7x:2x2x1
jax: 0.10.0
libtpu: 0.0.40
codegen_flags: <defaults>
</compile_context>

<pallas_src>
import functools

import jax
import jax.numpy as jnp
from jax import lax
from jax.experimental import pallas as pl
from jax.experimental.pallas import tpu as pltpu

_SUBLANE = 8
_LANE = 128


def _round_up(a, b):
    return -(-a // b) * b


def _dice_bce_kernel(x_ref, t_ref, o_ref, *, spp, block_rows, valid_rows,
                     need_mask):
    """Accumulates partial sums into the o_ref block (1, 4, 8, 128):

      [0] sum(sigmoid(x) * t)   (intersection)
      [1] sum(sigmoid(x))
      [2] sum(t)
      [3] sum(per-element BCE)
    """
    i = pl.program_id(1)  # inner (reduction) axis

    @pl.when(i == 0)
    def _init():
        o_ref[...] = jnp.zeros_like(o_ref)

    x = x_ref[...].astype(jnp.float32)   # (block_rows, 128)
    t = t_ref[...].astype(jnp.float32)

    if need_mask:
        # Rows at/after `valid_rows` are grid padding (unspecified values from
        # boundary / clamped block reads): force them to contribute ~0.
        s = pl.program_id(0)
        start = (s * spp + i) * block_rows
        row_ids = start + lax.broadcasted_iota(jnp.int32, x.shape, 0)
        keep = row_ids < valid_rows
        x = jnp.where(keep, x, -100.0)   # sigmoid(-100) ~ 3.8e-44 -> ~0 sums
        t = jnp.where(keep, t, 0.0)

    # Numerically stable sigmoid + log-sigmoid pieces: 3 EUP ops per element
    # (exp, vrcp, log). Approx reciprocal + 1 Newton step keeps f32 accuracy
    # while staying off the VALU divide expansion.
    e = jnp.exp(-jnp.abs(x))
    d = 1.0 + e
    r0 = pl.reciprocal(d, approx=True)
    r = r0 * (2.0 - d * r0)              # Newton refinement of 1/d
    p = jnp.where(x >= 0, r, e * r)      # sigmoid(x)
    lse = jnp.log(d)                     # softplus(-|x|) = -log(sigmoid(|x|))
    u = jnp.minimum(x, 0.0) - lse        # log(sigmoid(x)), unclamped
    # torch.binary_cross_entropy clamps log(p) and log(1-p) at -100.
    log_p = jnp.maximum(u, -100.0)
    log_1mp = jnp.maximum(u - x, -100.0)  # log(1 - sigmoid(x)) = u - x
    bce = -(log_1mp + t * (log_p - log_1mp))

    def fold(v):
        # (block_rows, 128) -> (8, 128): pure VPU vreg adds (no XLU reduce).
        return jnp.sum(v.reshape(-1, _SUBLANE, _LANE), axis=0)

    o_ref[0, 0] += fold(p * t)
    o_ref[0, 1] += fold(p)
    o_ref[0, 2] += fold(t)
    o_ref[0, 3] += fold(bce)


def _hw_plan():
    """Chip-dependent tiling: (max_block_rows, splits, is_v7)."""
    kind = ""
    try:
        kind = jax.devices()[0].device_kind.lower()
    except Exception:  # pragma: no cover - CPU/interpret fallback
        pass
    is_v7 = ("v7" in kind) or ("tpu7" in kind)
    is_v6 = "v6" in kind
    if is_v7 or is_v6:
        # 8192 rows f32 = 4 MiB/input/buffer; 16 MiB double-buffered < 32 MiB
        # default scoped VMEM on v6e/v7x.
        max_block_rows = 8192
    else:
        # v5e default scoped VMEM is 16 MiB -> keep inputs at 8 MiB total.
        max_block_rows = 4096
    splits = 2 if is_v7 else 1   # only v7x has 2 TensorCores to shard across
    return max_block_rows, splits, is_v7


def dice_bce_loss(inputs, targets, smooth=1e-5):
    """DiceBCELoss forward (BCE-with-logits mean + soft Dice loss).

    Callers should pass inputs/targets in their narrowest dtype (bf16 logits,
    bf16/int masks): the kernel DMAs the native dtype and upcasts in VMEM.
    """
    x = jnp.reshape(inputs, (-1,))
    t = jnp.reshape(targets, (-1,))
    n = x.shape[0]

    max_block_rows, splits, is_v7 = _hw_plan()

    # ---- Tiling plan (python ints; shapes are static) --------------------
    rows = -(-n // _LANE)                       # rows of the (rows, 128) view
    n_row_aligned = rows * _LANE
    block_rows = min(max_block_rows, _round_up(rows, _SUBLANE))
    n_blocks = -(-rows // block_rows)           # real blocks covering the data
    total_steps = _round_up(n_blocks, splits)
    spp = total_steps // splits                 # inner steps per split
    need_mask = (total_steps * block_rows) != rows

    # Pad only to lane granularity (< 128 elements). When n is already a
    # multiple of 128 (common), no pad happens and the reshape is a free
    # bitcast. Pad values are benign (sigmoid(-100) ~ 0, target 0).
    if n_row_aligned != n:
        x = jnp.pad(x, (0, n_row_aligned - n), constant_values=-100.0)
        t = jnp.pad(t, (0, n_row_aligned - n), constant_values=0)
    x2 = x.reshape(rows, _LANE)
    t2 = t.reshape(rows, _LANE)

    # Grid steps past the last real block (only when rounding up for the
    # 2-core split) re-read the last real block; in-kernel masking zeroes
    # their contribution, so DMAs never go out of bounds.
    last_block = n_blocks - 1
    if total_steps == n_blocks:
        in_map = lambda s, i: (s * spp + i, 0)
    else:
        in_map = lambda s, i: (jnp.minimum(s * spp + i, last_block), 0)

    in_blk = pl.BlockSpec((block_rows, _LANE), in_map)
    out_blk = pl.BlockSpec((1, 4, _SUBLANE, _LANE), lambda s, i: (s, 0, 0, 0))

    kernel = functools.partial(
        _dice_bce_kernel,
        spp=spp, block_rows=block_rows, valid_rows=rows, need_mask=need_mask)

    if is_v7 and splits == 2:
        # Shard the leading split axis across v7x's two TensorCores; fall back
        # to plain semantics if the compiler rejects core-parallel here.
        semantics_options = ((pltpu.CORE_PARALLEL, pltpu.ARBITRARY),
                             ("parallel", "arbitrary"))
    else:
        semantics_options = (("parallel", "arbitrary"),)

    partial_sums = None
    last_err = None
    for dims in semantics_options:
        try:
            partial_sums = pl.pallas_call(
                kernel,
                out_shape=jax.ShapeDtypeStruct(
                    (splits, 4, _SUBLANE, _LANE), jnp.float32),
                grid_spec=pltpu.PrefetchScalarGridSpec(
                    num_scalar_prefetch=0,
                    grid=(splits, spp),
                    in_specs=[in_blk, in_blk],
                    out_specs=out_blk,
                ),
                compiler_params=pltpu.CompilerParams(
                    dimension_semantics=dims),
            )(x2, t2)
            break
        except Exception as e:  # pragma: no cover - core-parallel fallback
            last_err = e
    if partial_sums is None:
        raise last_err

    # Final cross-lane reduction + scalar combine (tiny, done once in XLA).
    sums = jnp.sum(partial_sums, axis=(0, 2, 3))    # (4,)
    intersection, sum_p, sum_t, bce_sum = sums[0], sums[1], sums[2], sums[3]
    dice_loss = 1.0 - (2.0 * intersection + smooth) / (sum_p + sum_t + smooth)
    bce_mean = bce_sum / jnp.float32(n)              # mean over TRUE n
    return bce_mean + dice_loss


def _reference_dice_bce(inputs, targets, smooth=1e-5):
    """Pure-JAX reference mirroring the PyTorch module."""
    p = jax.nn.sigmoid(jnp.reshape(inputs, (-1,)).astype(jnp.float32))
    t = jnp.reshape(targets, (-1,)).astype(jnp.float32)
    intersection = jnp.sum(p * t)
    dice = 1.0 - (2.0 * intersection + smooth) / (jnp.sum(p) + jnp.sum(t) + smooth)
    log_p = jnp.maximum(jnp.log(p), -100.0)
    log_1mp = jnp.maximum(jnp.log(1.0 - p), -100.0)
    bce = jnp.mean(-(t * log_p + (1.0 - t) * log_1mp))
    return bce + dice


if __name__ == "__main__":
    key = jax.random.PRNGKey(0)
    k_logits, k_targets = jax.random.split(key)

    # Small segmentation-style shapes (NCHW logits, binary targets).
    shape = (2, 4, 16, 16)
    logits = jax.random.normal(k_logits, shape, dtype=jnp.float32)
    targets = (jax.random.uniform(k_targets, shape) > 0.5).astype(jnp.float32)

    loss = jax.block_until_ready(dice_bce_loss(logits, targets))
    ref = jax.block_until_ready(_reference_dice_bce(logits, targets))
    assert jnp.allclose(loss, ref, rtol=1e-5, atol=1e-5), (loss, ref)

    print("KERNEL_OK")
</pallas_src>

<mosaic_0001>
module attributes {stable_mosaic.version = 11 : i64} {
  func.func @_dice_bce_kernel(%arg0: i32, %arg1: i32, %arg2: memref<16x128xf32, #tpu.memory_space<vmem>>, %arg3: memref<16x128xf32, #tpu.memory_space<vmem>>, %arg4: memref<1x4x8x128xf32, #tpu.memory_space<vmem>>) attributes {dimension_semantics = [#tpu.dimension_semantics<parallel>, #tpu.dimension_semantics<arbitrary>], iteration_bounds = array<i64: 1, 1>, scalar_prefetch = 0 : i64, scratch_operands = 0 : i64, tpu.core_type = #tpu.core_type<tc>, window_params = [{transform_indices = @transform_0, window_bounds = array<i64: 16, 128>}, {transform_indices = @transform_1, window_bounds = array<i64: 16, 128>}, {transform_indices = @transform_2, window_bounds = array<i64: 1, 4, 8, 128>}]} {
    %c0_i32 = arith.constant 0 : i32
    %0 = arith.cmpi eq, %arg1, %c0_i32 : i32
    %1 = arith.extui %0 : i1 to i32
    %c0_i32_0 = arith.constant 0 : i32
    %2 = arith.cmpi ne, %1, %c0_i32_0 : i32
    scf.if %2 {
      %cst_44 = arith.constant 0.000000e+00 : f32
      %67 = vector.broadcast %cst_44 : f32 to vector<1x4x8x128xf32>
      %c0_45 = arith.constant 0 : index
      %c0_46 = arith.constant 0 : index
      %c0_47 = arith.constant 0 : index
      %c0_48 = arith.constant 0 : index
      %68 = vector.load %arg4[%c0_45, %c0_46, %c0_47, %c0_48] : memref<1x4x8x128xf32, #tpu.memory_space<vmem>>, vector<1x4x8x128xf32>
      tpu.vector_store %arg4[%c0_45, %c0_46, %c0_47, %c0_48], %67 {strides = array<i32>} : memref<1x4x8x128xf32, #tpu.memory_space<vmem>>, vector<1x4x8x128xf32>,
    } else {
    }
    %c0 = arith.constant 0 : index
    %c0_1 = arith.constant 0 : index
    %3 = vector.load %arg2[%c0, %c0_1] : memref<16x128xf32, #tpu.memory_space<vmem>>, vector<16x128xf32>
    %c0_2 = arith.constant 0 : index
    %c0_3 = arith.constant 0 : index
    %4 = vector.load %arg3[%c0_2, %c0_3] : memref<16x128xf32, #tpu.memory_space<vmem>>, vector<16x128xf32>
    %5 = math.absf %3 : vector<16x128xf32>
    %cst = arith.constant 0.000000e+00 : f32
    %6 = vector.broadcast %cst : f32 to vector<16x128xf32>
    %7 = arith.subf %6, %5 : vector<16x128xf32>
    %8 = math.exp %7 : vector<16x128xf32>
    %cst_4 = arith.constant 1.000000e+00 : f32
    %9 = vector.broadcast %cst_4 : f32 to vector<16x128xf32>
    %10 = arith.addf %9, %8 : vector<16x128xf32>
    %11 = tpu.reciprocal %10 {approx = true} : vector<16x128xf32> -> vector<16x128xf32>
    %12 = arith.mulf %10, %11 : vector<16x128xf32>
    %cst_5 = arith.constant 2.000000e+00 : f32
    %13 = vector.broadcast %cst_5 : f32 to vector<16x128xf32>
    %14 = arith.subf %13, %12 : vector<16x128xf32>
    %15 = arith.mulf %11, %14 : vector<16x128xf32>
    %cst_6 = arith.constant 0.000000e+00 : f32
    %16 = vector.broadcast %cst_6 : f32 to vector<16x128xf32>
    %17 = arith.cmpf oge, %3, %16 : vector<16x128xf32>
    %18 = arith.mulf %8, %15 : vector<16x128xf32>
    %19 = arith.select %17, %15, %18 : vector<16x128xi1>, vector<16x128xf32>
    %20 = math.log %10 : vector<16x128xf32>
    %cst_7 = arith.constant 0.000000e+00 : f32
    %21 = vector.broadcast %cst_7 : f32 to vector<16x128xf32>
    %22 = arith.minimumf %3, %21 : vector<16x128xf32>
    %23 = arith.subf %22, %20 : vector<16x128xf32>
    %cst_8 = arith.constant -1.000000e+02 : f32
    %24 = vector.broadcast %cst_8 : f32 to vector<16x128xf32>
    %25 = arith.maximumf %23, %24 : vector<16x128xf32>
    %26 = arith.subf %23, %3 : vector<16x128xf32>
    %cst_9 = arith.constant -1.000000e+02 : f32
    %27 = vector.broadcast %cst_9 : f32 to vector<16x128xf32>
    %28 = arith.maximumf %26, %27 : vector<16x128xf32>
    %29 = arith.subf %25, %28 : vector<16x128xf32>
    %30 = arith.mulf %4, %29 : vector<16x128xf32>
    %31 = arith.addf %28, %30 : vector<16x128xf32>
    %cst_10 = arith.constant 0.000000e+00 : f32
    %32 = vector.broadcast %cst_10 : f32 to vector<16x128xf32>
    %33 = arith.subf %32, %31 : vector<16x128xf32>
    %c0_11 = arith.constant 0 : index
    %c0_12 = arith.constant 0 : index
    %c0_13 = arith.constant 0 : index
    %c0_14 = arith.constant 0 : index
    %34 = vector.load %arg4[%c0_11, %c0_12, %c0_13, %c0_14] : memref<1x4x8x128xf32, #tpu.memory_space<vmem>>, vector<1x1x8x128xf32>
    %35 = vector.shape_cast %34 : vector<1x1x8x128xf32> to vector<8x128xf32>
    %36 = arith.mulf %19, %4 : vector<16x128xf32>
    %37 = vector.shape_cast %36 : vector<16x128xf32> to vector<2x8x128xf32>
    %cst_15 = arith.constant dense<0.000000e+00> : vector<8x128xf32>
    %38 = vector.multi_reduction <add>, %37, %cst_15 [0] : vector<2x8x128xf32> to vector<8x128xf32>
    %39 = arith.addf %35, %38 : vector<8x128xf32>
    %c0_16 = arith.constant 0 : index
    %c0_17 = arith.constant 0 : index
    %c0_18 = arith.constant 0 : index
    %c0_19 = arith.constant 0 : index
    %40 = vector.load %arg4[%c0_16, %c0_17, %c0_18, %c0_19] : memref<1x4x8x128xf32, #tpu.memory_space<vmem>>, vector<1x1x8x128xf32>
    %41 = vector.shape_cast %40 : vector<1x1x8x128xf32> to vector<8x128xf32>
    %42 = vector.shape_cast %39 : vector<8x128xf32> to vector<1x1x8x128xf32>
    tpu.vector_store %arg4[%c0_16, %c0_17, %c0_18, %c0_19], %42 {strides = array<i32>} : memref<1x4x8x128xf32, #tpu.memory_space<vmem>>, vector<1x1x8x128xf32>,
    %c0_20 = arith.constant 0 : index
    %c1 = arith.constant 1 : index
    %c0_21 = arith.constant 0 : index
    %c0_22 = arith.constant 0 : index
    %43 = vector.load %arg4[%c0_20, %c1, %c0_21, %c0_22] : memref<1x4x8x128xf32, #tpu.memory_space<vmem>>, vector<1x1x8x128xf32>
    %44 = vector.shape_cast %43 : vector<1x1x8x128xf32> to vector<8x128xf32>
    %45 = vector.shape_cast %19 : vector<16x128xf32> to vector<2x8x128xf32>
    %cst_23 = arith.constant dense<0.000000e+00> : vector<8x128xf32>
    %46 = vector.multi_reduction <add>, %45, %cst_23 [0] : vector<2x8x128xf32> to vector<8x128xf32>
    %47 = arith.addf %44, %46 : vector<8x128xf32>
    %c0_24 = arith.constant 0 : index
    %c1_25 = arith.constant 1 : index
    %c0_26 = arith.constant 0 : index
    %c0_27 = arith.constant 0 : index
    %48 = vector.load %arg4[%c0_24, %c1_25, %c0_26, %c0_27] : memref<1x4x8x128xf32, #tpu.memory_space<vmem>>, vector<1x1x8x128xf32>
    %49 = vector.shape_cast %48 : vector<1x1x8x128xf32> to vector<8x128xf32>
    %50 = vector.shape_cast %47 : vector<8x128xf32> to vector<1x1x8x128xf32>
    tpu.vector_store %arg4[%c0_24, %c1_25, %c0_26, %c0_27], %50 {strides = array<i32>} : memref<1x4x8x128xf32, #tpu.memory_space<vmem>>, vector<1x1x8x128xf32>,
    %c0_28 = arith.constant 0 : index
    %c2 = arith.constant 2 : index
    %c0_29 = arith.constant 0 : index
    %c0_30 = arith.constant 0 : index
    %51 = vector.load %arg4[%c0_28, %c2, %c0_29, %c0_30] : memref<1x4x8x128xf32, #tpu.memory_space<vmem>>, vector<1x1x8x128xf32>
    %52 = vector.shape_cast %51 : vector<1x1x8x128xf32> to vector<8x128xf32>
    %53 = vector.shape_cast %4 : vector<16x128xf32> to vector<2x8x128xf32>
    %cst_31 = arith.constant dense<0.000000e+00> : vector<8x128xf32>
    %54 = vector.multi_reduction <add>, %53, %cst_31 [0] : vector<2x8x128xf32> to vector<8x128xf32>
    %55 = arith.addf %52, %54 : vector<8x128xf32>
    %c0_32 = arith.constant 0 : index
    %c2_33 = arith.constant 2 : index
    %c0_34 = arith.constant 0 : index
    %c0_35 = arith.constant 0 : index
    %56 = vector.load %arg4[%c0_32, %c2_33, %c0_34, %c0_35] : memref<1x4x8x128xf32, #tpu.memory_space<vmem>>, vector<1x1x8x128xf32>
    %57 = vector.shape_cast %56 : vector<1x1x8x128xf32> to vector<8x128xf32>
    %58 = vector.shape_cast %55 : vector<8x128xf32> to vector<1x1x8x128xf32>
    tpu.vector_store %arg4[%c0_32, %c2_33, %c0_34, %c0_35], %58 {strides = array<i32>} : memref<1x4x8x128xf32, #tpu.memory_space<vmem>>, vector<1x1x8x128xf32>,
    %c0_36 = arith.constant 0 : index
    %c3 = arith.constant 3 : index
    %c0_37 = arith.constant 0 : index
    %c0_38 = arith.constant 0 : index
    %59 = vector.load %arg4[%c0_36, %c3, %c0_37, %c0_38] : memref<1x4x8x128xf32, #tpu.memory_space<vmem>>, vector<1x1x8x128xf32>
    %60 = vector.shape_cast %59 : vector<1x1x8x128xf32> to vector<8x128xf32>
    %61 = vector.shape_cast %33 : vector<16x128xf32> to vector<2x8x128xf32>
    %cst_39 = arith.constant dense<0.000000e+00> : vector<8x128xf32>
    %62 = vector.multi_reduction <add>, %61, %cst_39 [0] : vector<2x8x128xf32> to vector<8x128xf32>
    %63 = arith.addf %60, %62 : vector<8x128xf32>
    %c0_40 = arith.constant 0 : index
    %c3_41 = arith.constant 3 : index
    %c0_42 = arith.constant 0 : index
    %c0_43 = arith.constant 0 : index
    %64 = vector.load %arg4[%c0_40, %c3_41, %c0_42, %c0_43] : memref<1x4x8x128xf32, #tpu.memory_space<vmem>>, vector<1x1x8x128xf32>
    %65 = vector.shape_cast %64 : vector<1x1x8x128xf32> to vector<8x128xf32>
    %66 = vector.shape_cast %63 : vector<8x128xf32> to vector<1x1x8x128xf32>
    tpu.vector_store %arg4[%c0_40, %c3_41, %c0_42, %c0_43], %66 {strides = array<i32>} : memref<1x4x8x128xf32, #tpu.memory_space<vmem>>, vector<1x1x8x128xf32>,
    return
  }
  func.func @transform_0(%arg0: i32, %arg1: i32) -> (i32, i32) {
    %c1_i32 = arith.constant 1 : i32
    %0 = arith.muli %arg0, %c1_i32 : i32
    %1 = arith.addi %0, %arg1 : i32
    %c0_i32 = arith.constant 0 : i32
    %c0_i32_0 = arith.constant 0 : i32
    return %1, %c0_i32 : i32, i32
  }
  func.func @transform_1(%arg0: i32, %arg1: i32) -> (i32, i32) {
    %c1_i32 = arith.constant 1 : i32
    %0 = arith.muli %arg0, %c1_i32 : i32
    %1 = arith.addi %0, %arg1 : i32
    %c0_i32 = arith.constant 0 : i32
    %c0_i32_0 = arith.constant 0 : i32
    return %1, %c0_i32 : i32, i32
  }
  func.func @transform_2(%arg0: i32, %arg1: i32) -> (i32, i32, i32, i32) {
    %c0_i32 = arith.constant 0 : i32
    %c0_i32_0 = arith.constant 0 : i32
    %c0_i32_1 = arith.constant 0 : i32
    %c0_i32_2 = arith.constant 0 : i32
    return %arg0, %c0_i32, %c0_i32_0, %c0_i32_1 : i32, i32, i32, i32
  }
}

</mosaic_0001>

<llo_original>
// kernel: tpu_custom_call.1
$region0: #{tpu_custom_call.1}
  #allocation0 [shape = 'u32[]', space=smem, size = 0x4, offset = 0x4, fixed_abs, tag = 'smem constant byte address 0x4 - core index']
  #allocation1 [shape = 'u32[144,128]{1,0:T(1,128)}', space=vmem, size = 0x12000, scoped, tag = 'internal scratch']
  %s0 = inlined_call_operand.hbm [shape: f32[16,128], index: 0, kind: input, shape index: {}]
  %s1 = inlined_call_operand.hbm [shape: f32[16,128], index: 1, kind: input, shape index: {}]
  %s2 = inlined_call_operand.hbm [shape: f32[1,4,8,128], index: 2, kind: output, shape index: {}]
  %s3 = sld [smem:[#allocation0]]
  $region30: #{tpu_custom_call.1} parent=0
    _
  %s5 = ssub.s32 1, %s3
  %s6 = scalar_select 0, %s5, %s3
  $region1: #{tpu_custom_call.1} parent=0
    #allocation2 [shape = 'u8[8192]{0}', space=vmem, size = 0x2000, scoped, tag = 'input window, operand 0, single buffered']
    #allocation3 [shape = 's32[1]{0}', space=sflag, size = 0x4, scoped, tag = 'scoped memory for tpu_custom_call.1']
    #allocation4 [shape = 's32[1]{0}', space=sflag, size = 0x4, scoped, tag = 'scoped memory for tpu_custom_call.1']
    #allocation5 [shape = 'u8[8192]{0}', space=vmem, size = 0x2000, scoped, tag = 'input window, operand 1, single buffered']
    #allocation6 [shape = 's32[1]{0}', space=sflag, size = 0x4, scoped, tag = 'scoped memory for tpu_custom_call.1']
    #allocation7 [shape = 'u8[16384]{0}', space=vmem, size = 0x4000, scoped, tag = 'output window, operand 0, single buffered']
    %7 = vsyncpa [#allocation3], 0
    %8 = vsyncpa [#allocation6], 0
    %9 = vsyncpa [#allocation4], 0
    // Predicated region
    $region2: #{tpu_custom_call.1} parent=1 // pred_check
      _
    $region3: #{tpu_custom_call.1} parent=1 // pred_check_branch
      %11 = sbr.rel (0) target = $region5
    $region4: #{tpu_custom_call.1} parent=1 // pred_region
      %s12 = sadd.s32 0, 0
      %s13 = smul.u32 2, %s12
      %s15 = ssub.s32 256, 256
      %16 = vsyncadd [#allocation3], %s15
      %s17 = smul.addr %s13, 128
      %s18 = scalar_lea.hbm %s0, %s17
      %s19 = sshll.u32 [#allocation2], 4
      %s20 = int_to_ptr.vmem [resolvable:$true] %s19
      %25 = dma.hbm_to_vmem [thread:$0]  %s18, 256, %s20, [#allocation3], 128, 128, 8
    $region5: #{tpu_custom_call.1} parent=1 // pred_fallthru
      _
    // Predicated region
    $region6: #{tpu_custom_call.1} parent=1 // pred_check
      _
    $region7: #{tpu_custom_call.1} parent=1 // pred_check_branch
      %27 = sbr.rel (0) target = $region9
    $region8: #{tpu_custom_call.1} parent=1 // pred_region
      %s28 = sadd.s32 0, 0
      %s29 = smul.u32 2, %s28
      %s31 = ssub.s32 256, 256
      %32 = vsyncadd [#allocation6], %s31
      %s33 = smul.addr %s29, 128
      %s34 = scalar_lea.hbm %s1, %s33
      %s35 = sshll.u32 [#allocation5], 4
      %s36 = int_to_ptr.vmem [resolvable:$true] %s35
      %41 = dma.hbm_to_vmem [thread:$0]  %s34, 256, %s36, [#allocation6], 128, 128, 8
    $region9: #{tpu_custom_call.1} parent=1 // pred_fallthru
      _
    // Predicated region
    $region10: #{tpu_custom_call.1} parent=1 // pred_check
      _
    $region11: #{tpu_custom_call.1} parent=1 // pred_check_branch
      %43 = sbr.rel (0) target = $region13
    $region12: #{tpu_custom_call.1} parent=1 // pred_region
      %44 = dma.done [#allocation3], 256
    $region13: #{tpu_custom_call.1} parent=1 // pred_fallthru
      _
    // Predicated region
    $region14: #{tpu_custom_call.1} parent=1 // pred_check
      _
    $region15: #{tpu_custom_call.1} parent=1 // pred_check_branch
      %46 = sbr.rel (0) target = $region17
    $region16: #{tpu_custom_call.1} parent=1 // pred_region
      %47 = dma.done [#allocation6], 256
    $region17: #{tpu_custom_call.1} parent=1 // pred_fallthru
      _
    %s48 = sadd.s32 0, 0
    %s49 = smul.u32 2, %s48
    %s50 = sadd.s32 0, 0
    %s51 = smul.u32 2, %s50
    %p52 = scmp.eq.s32.totalorder 0, 0
    // Predicated region
    $region18: #{tpu_custom_call.1} parent=1 // pred_check
      %p53 = pneg %p52
    $region19: #{tpu_custom_call.1} parent=1 // pred_check_branch
      %55 = sbr.rel (%p53) target = $region21
    $region20: #{tpu_custom_call.1} parent=1 // pred_region
      %56 = vst [vmem:[#allocation7] sm:$0xff] 0.0
      %57 = vst [vmem:[#allocation7 + $0x8] sm:$0xff] 0.0
      %58 = vst [vmem:[#allocation7 + $0x10] sm:$0xff] 0.0
      %59 = vst [vmem:[#allocation7 + $0x18] sm:$0xff] 0.0
    $region21: #{tpu_custom_call.1} parent=1 // pred_fallthru
      _
    %v60 = vld [vmem:[#allocation2] sm:$0xff]
    %v61 = vld [vmem:[#allocation2 + $0x8] sm:$0xff]
    %v62 = vld [vmem:[#allocation5] sm:$0xff]
    %v63 = vld [vmem:[#allocation5 + $0x8] sm:$0xff]
    %v64 = vand.u32 2147483647, %v60
    %v65 = vand.u32 2147483647, %v61
    %v66 = vsub.f32 0.0, %v64
    %v67 = vsub.f32 0.0, %v65
    %v68 = vmul.f32 %v66, 1.442695
    %v69 = vpow.pop %v68
    %v70 = vmul.f32 %v67, 1.442695
    %v71 = vpow.pop %v70
    %v72 = vadd.f32 %v69, 1.0
    %v73 = vadd.f32 %v71, 1.0
    %v74 = vrcp.pop %v72
    %v75 = vrcp.pop %v73
    %v76 = vmul.f32 %v72, %v74
    %v77 = vmul.f32 %v73, %v75
    %v78 = vsub.f32 2.0, %v76
    %v79 = vsub.f32 2.0, %v77
    %v80 = vmul.f32 %v74, %v78
    %v81 = vmul.f32 %v75, %v79
    %vm82 = vcmp.ge.f32.partialorder %v60, 0.0
    %vm83 = vcmp.ge.f32.partialorder %v61, 0.0
    %v84 = vmul.f32 %v69, %v80
    %v85 = vmul.f32 %v71, %v81
    %v86 = vsel %vm82, %v80, %v84
    %v87 = vsel %vm83, %v81, %v85
    %v88 = vlog2.pop %v72
    %v89 = vmul.f32 %v88, 0.6931472
    %v90 = vlog2.pop %v73
    %v91 = vmul.f32 %v90, 0.6931472
    %v92 = vmin.f32 %v60, 0.0
    %v93 = vmin.f32 %v61, 0.0
    %v94 = vsub.f32 %v92, %v89
    %v95 = vsub.f32 %v93, %v91
    %v96 = vmax.f32 %v94, -100.0
    %v97 = vmax.f32 %v95, -100.0
    %v98 = vsub.f32 %v94, %v60
    %v99 = vsub.f32 %v95, %v61
    %v100 = vmax.f32 %v98, -100.0
    %v101 = vmax.f32 %v99, -100.0
    %v102 = vsub.f32 %v96, %v100
    %v103 = vsub.f32 %v97, %v101
    %v104 = vmul.f32 %v62, %v102
    %v105 = vmul.f32 %v63, %v103
    %v106 = vadd.f32 %v100, %v104
    %v107 = vadd.f32 %v101, %v105
    %v108 = vsub.f32 0.0, %v106
    %v109 = vsub.f32 0.0, %v107
    %v110 = vld [vmem:[#allocation7] sm:$0xff]
    %v111 = vmul.f32 %v86, %v62
    %v112 = vmul.f32 %v87, %v63
    %v113 = vadd.f32 %v111, %v112
    %v114 = vadd.f32 %v110, %v113
    %115 = vst [vmem:[#allocation7] sm:$0xff] %v114
    %s116 = scalar_lea.vmem [#allocation7], 8
    %v117 = vld [vmem:[%s116] sm:$0xff]
    %v118 = vadd.f32 %v86, %v87
    %v119 = vadd.f32 %v117, %v118
    %120 = vst [vmem:[%s116] sm:$0xff] %v119
    %s121 = scalar_lea.vmem [#allocation7], 16
    %v122 = vld [vmem:[%s121] sm:$0xff]
    %v123 = vadd.f32 %v62, %v63
    %v124 = vadd.f32 %v122, %v123
    %125 = vst [vmem:[%s121] sm:$0xff] %v124
    %s126 = scalar_lea.vmem [#allocation7], 24
    %v127 = vld [vmem:[%s126] sm:$0xff]
    %v128 = vadd.f32 %v108, %v109
    %v129 = vadd.f32 %v127, %v128
    %130 = vst [vmem:[%s126] sm:$0xff] %v129
    // Predicated region
    $region22: #{tpu_custom_call.1} parent=1 // pred_check
      _
    $region23: #{tpu_custom_call.1} parent=1 // pred_check_branch
      %132 = sbr.rel (0) target = $region25
    $region24: #{tpu_custom_call.1} parent=1 // pred_region
      %s134 = ssub.s32 512, 512
      %135 = vsyncadd [#allocation4], %s134
      %s136 = sshll.u32 [#allocation7], 4
      %s137 = int_to_ptr.vmem [resolvable:$true] %s136
      %142 = dma.vmem_to_hbm [thread:$0]  %s137, 512, %s2, [#allocation4], 128, 128, 8
    $region25: #{tpu_custom_call.1} parent=1 // pred_fallthru
      _
    // Predicated region
    $region26: #{tpu_custom_call.1} parent=1 // pred_check
      _
    $region27: #{tpu_custom_call.1} parent=1 // pred_check_branch
      %144 = sbr.rel (0) target = $region29
    $region28: #{tpu_custom_call.1} parent=1 // pred_region
      %145 = dma.done [#allocation4], 512
    $region29: #{tpu_custom_call.1} parent=1 // pred_fallthru
      _
    %146 = vsyncpa [#allocation3], 1
    %147 = vsyncpa [#allocation6], 1
    %148 = vsyncpa [#allocation4], 1

</llo_original>
